<compile_context>
chip_gen: v7x
topology: tpu7x:2x2x1
jax: 0.10.0
libtpu: 0.0.40
codegen_flags: <defaults>
</compile_context>

<pallas_src>
import jax
import jax.numpy as jnp
from jax.experimental import pallas as pl
from jax.experimental.pallas import tpu as pltpu


def mlp_decoder_kernel(x_ref, *refs):
    """Fused Linear->ReLU chain for one (TILE_B, in_dim) row tile.

    refs = (w0, b0, w1, b1, ..., wL, bL, out_ref)
    Weights/biases are full arrays resident in VMEM (constant index_map).
    """
    out_ref = refs[-1]
    param_refs = refs[:-1]
    n_layers = len(param_refs) // 2

    # f32 tile from HBM, cast to bf16 in-kernel (no wrapper-side cast pass).
    h = x_ref[...].astype(jnp.bfloat16)
    for i in range(n_layers):
        w = param_refs[2 * i][...]              # bf16 weights -> MXU
        b = param_refs[2 * i + 1][...]          # f32 (1, out) bias row
        # bf16 x bf16 matmul, f32 accumulation; bias-add / ReLU stay f32.
        h = jnp.dot(h, w, preferred_element_type=jnp.float32) + b
        if i < n_layers - 1:                    # doLastRelu=False
            h = jnp.maximum(h, 0.0).astype(jnp.bfloat16)
    out_ref[...] = h.astype(out_ref.dtype)


def _select_tile_b(B, target_tile=4096, min_grid_steps=4):
    """Sublane-aligned batch tile: big enough to amortize per-step overhead,
    small enough to keep >= min_grid_steps grid steps (megacore / pipeline)."""
    if B <= 8:
        return B                                 # full-array block, one step
    per_step = -(-B // min_grid_steps)           # ceil(B / min_grid_steps)
    per_step = ((per_step + 7) // 8) * 8         # sublane align
    tile = min(target_tile, per_step)
    tile = max(8, tile)
    return tile


def mlp_decoder_forward(cw, weights, biases, num_points,
                        out_dtype=jnp.float32, target_tile=4096):
    """cw: (B, dims[0]) f32.  weights[i]: (in_i, out_i).  Returns (B, num_points, 3)."""
    B, in_dim = cw.shape
    out_dim = weights[-1].shape[1]
    assert out_dim == 3 * num_points
    assert cw.dtype == jnp.float32

    # bf16 MXU weight operands; biases stay f32.
    weights_bf16 = [w.astype(jnp.bfloat16) for w in weights]
    biases_f32 = [b.astype(jnp.float32).reshape(1, -1) for b in biases]

    tile_b = _select_tile_b(B, target_tile=target_tile)
    grid = (pl.cdiv(B, tile_b),)                 # ragged last tile: OOB stores masked

    params = []
    for w, b in zip(weights_bf16, biases_f32):
        params.append(w)
        params.append(b)

    # Row tiles for activations; resident full-array blocks for parameters.
    in_specs = [pl.BlockSpec((tile_b, in_dim), lambda i: (i, 0))]
    for p in params:
        in_specs.append(pl.BlockSpec(p.shape, lambda i: (0, 0)))
    out_spec = pl.BlockSpec((tile_b, out_dim), lambda i: (i, 0))

    out_bytes_per_elem = jnp.dtype(out_dtype).itemsize
    flops = 2 * B * sum(w.shape[0] * w.shape[1] for w in weights)
    bytes_accessed = (cw.size * 4
                      + sum(w.size * 2 for w in weights_bf16)
                      + sum(b.size * 4 for b in biases_f32)
                      + B * out_dim * out_bytes_per_elem)
    cost = pl.CostEstimate(flops=flops, transcendentals=0,
                           bytes_accessed=bytes_accessed)

    # Explicit VMEM budget from the real footprint (safe on v7x's 64 MiB):
    #   double-buffered x / out blocks + resident params + f32 intermediates.
    param_bytes = sum(w.size * 2 for w in weights_bf16) + sum(b.size * 4 for b in biases_f32)
    max_width = max(max(w.shape[1] for w in weights), in_dim)
    x_block = tile_b * in_dim * 4
    o_block = tile_b * out_dim * out_bytes_per_elem
    interm = 4 * tile_b * max_width * 4          # generous headroom for f32 temps
    vmem_need = 2 * (x_block + o_block) + param_bytes + interm
    vmem_limit = int(min(max(2 * vmem_need, 16 << 20), 60 << 20))

    flat_out = pl.pallas_call(
        mlp_decoder_kernel,
        out_shape=jax.ShapeDtypeStruct((B, out_dim), out_dtype),
        grid=grid,
        in_specs=in_specs,
        out_specs=out_spec,
        compiler_params=pltpu.CompilerParams(
            dimension_semantics=("parallel",),
            vmem_limit_bytes=vmem_limit),
        cost_estimate=cost,
    )(cw, *params)

    # torch .view(B, num_points, -1): row-major reshape == jnp.reshape.
    return flat_out.reshape(B, num_points, 3)


def mlp_decoder_reference_f32(cw, weights, biases):
    """Pure f32 reference (matches torch module numerics)."""
    h = cw
    for i, (w, b) in enumerate(zip(weights, biases)):
        h = h @ w + b.reshape(1, -1)
        if i < len(weights) - 1:
            h = jnp.maximum(h, 0.0)
    return h


def mlp_decoder_reference_mixed(cw, weights, biases):
    """Reference mirroring the kernel's bf16-operand / f32-accumulate path."""
    h = cw.astype(jnp.bfloat16)
    for i, (w, b) in enumerate(zip(weights, biases)):
        h = jnp.dot(h, w.astype(jnp.bfloat16),
                    preferred_element_type=jnp.float32) + b.reshape(1, -1)
        if i < len(weights) - 1:
            h = jnp.maximum(h, 0.0).astype(jnp.bfloat16)
    return h


if __name__ == "__main__":
    # net_config equivalent
    num_points = 8
    dims = [32, 64, 64]                        # PointwiseMLP dims
    layer_dims = dims + [3 * num_points]       # [32, 64, 64, 24]
    B = 4

    key = jax.random.PRNGKey(0)
    key, kx = jax.random.split(key)
    cw = jax.random.normal(kx, (B, layer_dims[0]), dtype=jnp.float32)

    weights, biases = [], []
    for li in range(len(layer_dims) - 1):
        fan_in, fan_out = layer_dims[li], layer_dims[li + 1]
        key, kw, kb = jax.random.split(key, 3)
        scale = 1.0 / jnp.sqrt(jnp.float32(fan_in))
        # stored as (in, out) == torch weight (out, in) transposed
        weights.append(
            (jax.random.uniform(kw, (fan_in, fan_out), jnp.float32) * 2 - 1) * scale)
        biases.append(
            (jax.random.uniform(kb, (1, fan_out), jnp.float32) * 2 - 1) * scale)

    # --- small batch (single full-array tile) ---
    out = mlp_decoder_forward(cw, weights, biases, num_points)
    out = jax.block_until_ready(out)
    assert out.shape == (B, num_points, 3), out.shape

    ref_mixed = mlp_decoder_reference_mixed(cw, weights, biases).reshape(B, num_points, 3)
    assert jnp.allclose(out, ref_mixed, atol=1e-3, rtol=1e-3), \
        "mismatch vs mixed-precision reference"

    ref_f32 = mlp_decoder_reference_f32(cw, weights, biases).reshape(B, num_points, 3)
    assert jnp.allclose(out, ref_f32, atol=1e-1, rtol=5e-2), \
        "mismatch vs f32 reference (beyond bf16 tolerance)"

    # --- larger, non-tile-aligned batch: exercises multi-step grid + ragged last tile ---
    B2 = 300
    key, kx2 = jax.random.split(key)
    cw2 = jax.random.normal(kx2, (B2, layer_dims[0]), dtype=jnp.float32)
    out2 = jax.block_until_ready(
        mlp_decoder_forward(cw2, weights, biases, num_points))
    assert out2.shape == (B2, num_points, 3), out2.shape
    ref2 = mlp_decoder_reference_mixed(cw2, weights, biases).reshape(B2, num_points, 3)
    assert jnp.allclose(out2, ref2, atol=1e-3, rtol=1e-3), \
        "mismatch vs reference (batched grid, ragged last tile)"

    # --- optional bf16-output path (halves the dominant HBM stream) ---
    out3 = jax.block_until_ready(
        mlp_decoder_forward(cw2, weights, biases, num_points,
                            out_dtype=jnp.bfloat16))
    assert out3.shape == (B2, num_points, 3) and out3.dtype == jnp.bfloat16
    assert jnp.allclose(out3.astype(jnp.float32), ref2, atol=2e-2, rtol=2e-2), \
        "mismatch vs reference (bf16 output path)"

    print("KERNEL_OK")
</pallas_src>

<mosaic_0001>
module attributes {stable_mosaic.version = 11 : i64} {
  func.func @mlp_decoder_kernel(%arg0: i32, %arg1: memref<4x32xf32, #tpu.memory_space<vmem>>, %arg2: memref<32x64xbf16, #tpu.memory_space<vmem>>, %arg3: memref<1x64xf32, #tpu.memory_space<vmem>>, %arg4: memref<64x64xbf16, #tpu.memory_space<vmem>>, %arg5: memref<1x64xf32, #tpu.memory_space<vmem>>, %arg6: memref<64x24xbf16, #tpu.memory_space<vmem>>, %arg7: memref<1x24xf32, #tpu.memory_space<vmem>>, %arg8: memref<4x24xf32, #tpu.memory_space<vmem>>) attributes {dimension_semantics = [#tpu.dimension_semantics<parallel>], iteration_bounds = array<i64: 1>, scalar_prefetch = 0 : i64, scratch_operands = 0 : i64, tpu.core_type = #tpu.core_type<tc>, window_params = [{transform_indices = @transform_0, window_bounds = array<i64: 4, 32>}, {pipeline_mode = #tpu.pipeline_mode<synchronous>, transform_indices = @transform_1, window_bounds = array<i64: 32, 64>}, {pipeline_mode = #tpu.pipeline_mode<synchronous>, transform_indices = @transform_2, window_bounds = array<i64: 1, 64>}, {pipeline_mode = #tpu.pipeline_mode<synchronous>, transform_indices = @transform_3, window_bounds = array<i64: 64, 64>}, {pipeline_mode = #tpu.pipeline_mode<synchronous>, transform_indices = @transform_4, window_bounds = array<i64: 1, 64>}, {pipeline_mode = #tpu.pipeline_mode<synchronous>, transform_indices = @transform_5, window_bounds = array<i64: 64, 24>}, {pipeline_mode = #tpu.pipeline_mode<synchronous>, transform_indices = @transform_6, window_bounds = array<i64: 1, 24>}, {transform_indices = @transform_7, window_bounds = array<i64: 4, 24>}]} {
    %c0 = arith.constant 0 : index
    %c0_0 = arith.constant 0 : index
    %0 = vector.load %arg1[%c0, %c0_0] : memref<4x32xf32, #tpu.memory_space<vmem>>, vector<4x32xf32>
    %1 = arith.truncf %0 : vector<4x32xf32> to vector<4x32xbf16>
    %c0_1 = arith.constant 0 : index
    %c0_2 = arith.constant 0 : index
    %2 = vector.load %arg2[%c0_1, %c0_2] : memref<32x64xbf16, #tpu.memory_space<vmem>>, vector<32x64xbf16>
    %c0_3 = arith.constant 0 : index
    %c0_4 = arith.constant 0 : index
    %3 = vector.load %arg3[%c0_3, %c0_4] : memref<1x64xf32, #tpu.memory_space<vmem>>, vector<1x64xf32>
    %cst = arith.constant dense<0.000000e+00> : vector<4x64xf32>
    %4 = tpu.matmul %1, %2, %cst {dimension_numbers = #tpu.dot_dimension_numbers<[1], [0], [0], [1], [0, 0, 1, 1], [], []>} : vector<4x32xbf16>, vector<32x64xbf16>, vector<4x64xf32> -> vector<4x64xf32>
    %5 = vector.broadcast %3 : vector<1x64xf32> to vector<4x64xf32>
    %6 = arith.addf %4, %5 : vector<4x64xf32>
    %cst_5 = arith.constant 0.000000e+00 : f32
    %7 = vector.broadcast %cst_5 : f32 to vector<4x64xf32>
    %8 = arith.maximumf %6, %7 : vector<4x64xf32>
    %9 = arith.truncf %8 : vector<4x64xf32> to vector<4x64xbf16>
    %c0_6 = arith.constant 0 : index
    %c0_7 = arith.constant 0 : index
    %10 = vector.load %arg4[%c0_6, %c0_7] : memref<64x64xbf16, #tpu.memory_space<vmem>>, vector<64x64xbf16>
    %c0_8 = arith.constant 0 : index
    %c0_9 = arith.constant 0 : index
    %11 = vector.load %arg5[%c0_8, %c0_9] : memref<1x64xf32, #tpu.memory_space<vmem>>, vector<1x64xf32>
    %cst_10 = arith.constant dense<0.000000e+00> : vector<4x64xf32>
    %12 = tpu.matmul %9, %10, %cst_10 {dimension_numbers = #tpu.dot_dimension_numbers<[1], [0], [0], [1], [0, 0, 1, 1], [], []>} : vector<4x64xbf16>, vector<64x64xbf16>, vector<4x64xf32> -> vector<4x64xf32>
    %13 = vector.broadcast %11 : vector<1x64xf32> to vector<4x64xf32>
    %14 = arith.addf %12, %13 : vector<4x64xf32>
    %cst_11 = arith.constant 0.000000e+00 : f32
    %15 = vector.broadcast %cst_11 : f32 to vector<4x64xf32>
    %16 = arith.maximumf %14, %15 : vector<4x64xf32>
    %17 = arith.truncf %16 : vector<4x64xf32> to vector<4x64xbf16>
    %c0_12 = arith.constant 0 : index
    %c0_13 = arith.constant 0 : index
    %18 = vector.load %arg6[%c0_12, %c0_13] : memref<64x24xbf16, #tpu.memory_space<vmem>>, vector<64x24xbf16>
    %c0_14 = arith.constant 0 : index
    %c0_15 = arith.constant 0 : index
    %19 = vector.load %arg7[%c0_14, %c0_15] : memref<1x24xf32, #tpu.memory_space<vmem>>, vector<1x24xf32>
    %cst_16 = arith.constant dense<0.000000e+00> : vector<4x24xf32>
    %20 = tpu.matmul %17, %18, %cst_16 {dimension_numbers = #tpu.dot_dimension_numbers<[1], [0], [0], [1], [0, 0, 1, 1], [], []>} : vector<4x64xbf16>, vector<64x24xbf16>, vector<4x24xf32> -> vector<4x24xf32>
    %21 = vector.broadcast %19 : vector<1x24xf32> to vector<4x24xf32>
    %22 = arith.addf %20, %21 : vector<4x24xf32>
    %c0_17 = arith.constant 0 : index
    %c0_18 = arith.constant 0 : index
    %23 = vector.load %arg8[%c0_17, %c0_18] : memref<4x24xf32, #tpu.memory_space<vmem>>, vector<4x24xf32>
    tpu.vector_store %arg8[%c0_17, %c0_18], %22 {strides = array<i32>} : memref<4x24xf32, #tpu.memory_space<vmem>>, vector<4x24xf32>,
    return
  }
  func.func @transform_0(%arg0: i32) -> (i32, i32) {
    %c0_i32 = arith.constant 0 : i32
    %c0_i32_0 = arith.constant 0 : i32
    return %arg0, %c0_i32 : i32, i32
  }
  func.func @transform_1(%arg0: i32) -> (i32, i32) {
    %c0_i32 = arith.constant 0 : i32
    %c0_i32_0 = arith.constant 0 : i32
    %c0_i32_1 = arith.constant 0 : i32
    return %c0_i32, %c0_i32_0 : i32, i32
  }
  func.func @transform_2(%arg0: i32) -> (i32, i32) {
    %c0_i32 = arith.constant 0 : i32
    %c0_i32_0 = arith.constant 0 : i32
    %c0_i32_1 = arith.constant 0 : i32
    return %c0_i32, %c0_i32_0 : i32, i32
  }
  func.func @transform_3(%arg0: i32) -> (i32, i32) {
    %c0_i32 = arith.constant 0 : i32
    %c0_i32_0 = arith.constant 0 : i32
    %c0_i32_1 = arith.constant 0 : i32
    return %c0_i32, %c0_i32_0 : i32, i32
  }
  func.func @transform_4(%arg0: i32) -> (i32, i32) {
    %c0_i32 = arith.constant 0 : i32
    %c0_i32_0 = arith.constant 0 : i32
    %c0_i32_1 = arith.constant 0 : i32
    return %c0_i32, %c0_i32_0 : i32, i32
  }
  func.func @transform_5(%arg0: i32) -> (i32, i32) {
    %c0_i32 = arith.constant 0 : i32
    %c0_i32_0 = arith.constant 0 : i32
    %c0_i32_1 = arith.constant 0 : i32
    return %c0_i32, %c0_i32_0 : i32, i32
  }
  func.func @transform_6(%arg0: i32) -> (i32, i32) {
    %c0_i32 = arith.constant 0 : i32
    %c0_i32_0 = arith.constant 0 : i32
    %c0_i32_1 = arith.constant 0 : i32
    return %c0_i32, %c0_i32_0 : i32, i32
  }
  func.func @transform_7(%arg0: i32) -> (i32, i32) {
    %c0_i32 = arith.constant 0 : i32
    %c0_i32_0 = arith.constant 0 : i32
    return %arg0, %c0_i32 : i32, i32
  }
}

</mosaic_0001>

<llo_original>
// kernel: tpu_custom_call.1
$region0: #{tpu_custom_call.1}
  #allocation0 [shape = 'u32[]', space=smem, size = 0x4, offset = 0x4, fixed_abs, tag = 'smem constant byte address 0x4 - core index']
  #allocation1 [shape = 'u32[144,128]{1,0:T(1,128)}', space=vmem, size = 0x12000, scoped, tag = 'internal scratch']
  %s0 = inlined_call_operand.hbm [shape: f32[4,32], index: 0, kind: input, shape index: {}]
  %s1 = inlined_call_operand.vmem [shape: bf16[32,64], index: 1, kind: input, shape index: {}]
  %s2 = inlined_call_operand.vmem [shape: f32[1,64], index: 2, kind: input, shape index: {}]
  %s3 = inlined_call_operand.vmem [shape: bf16[64,64], index: 3, kind: input, shape index: {}]
  %s4 = inlined_call_operand.vmem [shape: f32[1,64], index: 4, kind: input, shape index: {}]
  %s5 = inlined_call_operand.vmem [shape: bf16[64,24], index: 5, kind: input, shape index: {}]
  %s6 = inlined_call_operand.vmem [shape: f32[1,24], index: 6, kind: input, shape index: {}]
  %s7 = inlined_call_operand.hbm [shape: f32[4,24], index: 7, kind: output, shape index: {}]
  %s8 = sld [smem:[#allocation0]]
  $region42: #{tpu_custom_call.1} parent=0
    _
  %s10 = ssub.s32 1, %s8
  %s11 = scalar_select 0, %s10, %s8
  $region1: #{tpu_custom_call.1} parent=0
    #allocation2 [shape = 'u8[2048]{0}', space=vmem, size = 0x800, scoped, tag = 'input window, operand 0, single buffered']
    #allocation3 [shape = 's32[1]{0}', space=sflag, size = 0x4, scoped, tag = 'scoped memory for tpu_custom_call.1']
    #allocation4 [shape = 's32[1]{0}', space=sflag, size = 0x4, scoped, tag = 'scoped memory for tpu_custom_call.1']
    #allocation5 [shape = 'u8[2048]{0}', space=vmem, size = 0x800, scoped, tag = 'output window, operand 0, single buffered']
    %12 = vsyncpa [#allocation3], 0
    %13 = vsyncpa [#allocation4], 0
    // Predicated region
    $region2: #{tpu_custom_call.1} parent=1 // pred_check
      _
    $region3: #{tpu_custom_call.1} parent=1 // pred_check_branch
      %15 = sbr.rel (0) target = $region5
    $region4: #{tpu_custom_call.1} parent=1 // pred_region
      %s17 = ssub.s32 64, 64
      %18 = vsyncadd [#allocation3], %s17
      %s20 = sshll.u32 [#allocation2], 4
      %s21 = int_to_ptr.vmem [resolvable:$true] %s20
      %23 = dma.hbm_to_vmem [thread:$0]  %s0, 64, %s21, [#allocation3]
    $region5: #{tpu_custom_call.1} parent=1 // pred_fallthru
      _
    // Predicated region
    $region6: #{tpu_custom_call.1} parent=1 // pred_check
      _
    $region7: #{tpu_custom_call.1} parent=1 // pred_check_branch
      %25 = sbr.rel (0) target = $region9
    $region8: #{tpu_custom_call.1} parent=1 // pred_region
      _
    $region9: #{tpu_custom_call.1} parent=1 // pred_fallthru
      _
    // Predicated region
    $region10: #{tpu_custom_call.1} parent=1 // pred_check
      _
    $region11: #{tpu_custom_call.1} parent=1 // pred_check_branch
      %27 = sbr.rel (0) target = $region13
    $region12: #{tpu_custom_call.1} parent=1 // pred_region
      _
    $region13: #{tpu_custom_call.1} parent=1 // pred_fallthru
      _
    // Predicated region
    $region14: #{tpu_custom_call.1} parent=1 // pred_check
      _
    $region15: #{tpu_custom_call.1} parent=1 // pred_check_branch
      %29 = sbr.rel (0) target = $region17
    $region16: #{tpu_custom_call.1} parent=1 // pred_region
      _
    $region17: #{tpu_custom_call.1} parent=1 // pred_fallthru
      _
    // Predicated region
    $region18: #{tpu_custom_call.1} parent=1 // pred_check
      _
    $region19: #{tpu_custom_call.1} parent=1 // pred_check_branch
      %31 = sbr.rel (0) target = $region21
    $region20: #{tpu_custom_call.1} parent=1 // pred_region
      _
    $region21: #{tpu_custom_call.1} parent=1 // pred_fallthru
      _
    // Predicated region
    $region22: #{tpu_custom_call.1} parent=1 // pred_check
      _
    $region23: #{tpu_custom_call.1} parent=1 // pred_check_branch
      %33 = sbr.rel (0) target = $region25
    $region24: #{tpu_custom_call.1} parent=1 // pred_region
      _
    $region25: #{tpu_custom_call.1} parent=1 // pred_fallthru
      _
    // Predicated region
    $region26: #{tpu_custom_call.1} parent=1 // pred_check
      _
    $region27: #{tpu_custom_call.1} parent=1 // pred_check_branch
      %35 = sbr.rel (0) target = $region29
    $region28: #{tpu_custom_call.1} parent=1 // pred_region
      _
    $region29: #{tpu_custom_call.1} parent=1 // pred_fallthru
      _
    // Predicated region
    $region30: #{tpu_custom_call.1} parent=1 // pred_check
      _
    $region31: #{tpu_custom_call.1} parent=1 // pred_check_branch
      %37 = sbr.rel (0) target = $region33
    $region32: #{tpu_custom_call.1} parent=1 // pred_region
      %38 = dma.done [#allocation3], 64
    $region33: #{tpu_custom_call.1} parent=1 // pred_fallthru
      _
    %v40 = vld [vmem:[#allocation2] sm:$0xf]
    %v41 = vpack.c.bf16 %v40, %v40
    %v42 = vld [vmem:[%s1] sm:$0xf]
    %v43 = vld [vmem:[%s1 + $0x4] sm:$0xf]
    %v44 = vld [vmem:[%s1 + $0x8] sm:$0xf]
    %v45 = vld [vmem:[%s1 + $0xc] sm:$0xf]
    %v46 = vld [vmem:[%s2] sm:$0x1]
    %v48 = vlaneseq
    %v49 = vshrl.u32 %v48, 7
    %v50 = vsub.s32 0, %v49
    %v51 = vrot.slane %v46, %v50
    %v57 = vunpack.c.l.b16 %v42
    %v58 = vunpack.c.l.b16 %v43
    %v59 = vunpack.c.l.b16 %v44
    %v60 = vunpack.c.l.b16 %v45
    %v61 = vpack.c.b16 %v58, %v57
    %v62 = vpack.c.b16 %v60, %v59
    %vm65 = vcmask 261120
    %v67 = vsel %vm65, %v41, 0
    %69 = vmatprep.subr.bf16.mxu0 0
    %70 = vmatpush1.bf16.msra.mxu0 %v61
    %71 = vmatprep.subr.bf16.mxu0 0
    %72 = vmatpush1.bf16.msra.mxu0 %v62
    %73 = vmatprep.subr.bf16.mxu0 0
    %74 = vmatpush1.bf16.msra.mxu0 0
    %75 = vmatprep.subr.bf16.mxu0 0
    %76 = vmatpush1.bf16.msra.mxu0 0
    %77 = vmatprep.subr.bf16.mxu0 0
    %78 = vmatpush1.bf16.msra.mxu0 0
    %79 = vmatprep.subr.bf16.mxu0 0
    %80 = vmatpush1.bf16.msra.mxu0 0
    %81 = vmatprep.subr.bf16.mxu0 0
    %82 = vmatpush1.bf16.msra.mxu0 0
    %83 = vmatprep.subr.bf16.mxu0 0
    %84 = vmatpush1.bf16.msra.mxu0 0
    %85 = vmatprep.subr.bf16.mxu0 0
    %86 = vmatpush1.bf16.msra.mxu0 0
    %87 = vmatprep.subr.bf16.mxu0 0
    %88 = vmatpush1.bf16.msra.mxu0 0
    %89 = vmatprep.subr.bf16.mxu0 0
    %90 = vmatpush1.bf16.msra.mxu0 0
    %91 = vmatprep.subr.bf16.mxu0 0
    %92 = vmatpush1.bf16.msra.mxu0 0
    %93 = vmatprep.subr.bf16.mxu0 0
    %94 = vmatpush1.bf16.msra.mxu0 0
    %95 = vmatprep.subr.bf16.mxu0 0
    %96 = vmatpush1.bf16.msra.mxu0 0
    %97 = vmatprep.subr.bf16.mxu0 0
    %98 = vmatpush1.bf16.msra.mxu0 0
    %99 = vmatprep.subr.bf16.mxu0 0
    %100 = vmatpush1.bf16.msra.mxu0 0
    %101 = vmatprep.mubr.bf16.mxu0 0
    %102 = vmatmul.mubr.bf16.gmra.mrb[0].mxu0 %v67
    %v103 = vpop.f32.mrb[0].mxu0
    %v104 = vadd.f32 %v51, %v103
    %v105 = vpop.f32.mrb[0].mxu0
    %v106 = vpop.f32.mrb[0].mxu0
    %v107 = vpop.f32.mrb[0].mxu0
    %108 = vdwg.mxu0
    %v109 = vmax.f32 %v104, 0.0
    %v110 = vpack.c.bf16 %v109, %v109
    %v111 = vld [vmem:[%s3] sm:$0xf]
    %v112 = vld [vmem:[%s3 + $0x4] sm:$0xf]
    %v113 = vld [vmem:[%s3 + $0x8] sm:$0xf]
    %v114 = vld [vmem:[%s3 + $0xc] sm:$0xf]
    %v115 = vld [vmem:[%s3 + $0x10] sm:$0xf]
    %v116 = vld [vmem:[%s3 + $0x14] sm:$0xf]
    %v117 = vld [vmem:[%s3 + $0x18] sm:$0xf]
    %v118 = vld [vmem:[%s3 + $0x1c] sm:$0xf]
    %v119 = vld [vmem:[%s4] sm:$0x1]
    %v121 = vlaneseq
    %v122 = vshrl.u32 %v121, 7
    %v123 = vsub.s32 0, %v122
    %v124 = vrot.slane %v119, %v123
    %v134 = vunpack.c.l.b16 %v111
    %v135 = vunpack.c.l.b16 %v112
    %v136 = vunpack.c.l.b16 %v113
    %v137 = vunpack.c.l.b16 %v114
    %v138 = vunpack.c.l.b16 %v115
    %v139 = vunpack.c.l.b16 %v116
    %v140 = vunpack.c.l.b16 %v117
    %v141 = vunpack.c.l.b16 %v118
    %v142 = vpack.c.b16 %v135, %v134
    %v143 = vpack.c.b16 %v137, %v136
    %v144 = vpack.c.b16 %v139, %v138
    %v145 = vpack.c.b16 %v141, %v140
    %vm150 = vcmask 523264
    %v152 = vsel %vm150, %v110, 0
    %154 = vmatprep.subr.bf16.mxu0 0
    %155 = vmatpush1.bf16.msra.mxu0 %v142
    %156 = vmatprep.subr.bf16.mxu0 0
    %157 = vmatpush1.bf16.msra.mxu0 %v143
    %158 = vmatprep.subr.bf16.mxu0 0
    %159 = vmatpush1.bf16.msra.mxu0 %v144
    %160 = vmatprep.subr.bf16.mxu0 0
    %161 = vmatpush1.bf16.msra.mxu0 %v145
    %162 = vmatprep.subr.bf16.mxu0 0
    %163 = vmatpush1.bf16.msra.mxu0 0
    %164 = vmatprep.subr.bf16.mxu0 0
    %165 = vmatpush1.bf16.msra.mxu0 0
    %166 = vmatprep.subr.bf16.mxu0 0
    %167 = vmatpush1.bf16.msra.mxu0 0
    %168 = vmatprep.subr.bf16.mxu0 0
    %169 = vmatpush1.bf16.msra.mxu0 0
    %170 = vmatprep.subr.bf16.mxu0 0
    %171 = vmatpush1.bf16.msra.mxu0 0
    %172 = vmatprep.subr.bf16.mxu0 0
    %173 = vmatpush1.bf16.msra.mxu0 0
    %174 = vmatprep.subr.bf16.mxu0 0
    %175 = vmatpush1.bf16.msra.mxu0 0
    %176 = vmatprep.subr.bf16.mxu0 0
    %177 = vmatpush1.bf16.msra.mxu0 0
    %178 = vmatprep.subr.bf16.mxu0 0
    %179 = vmatpush1.bf16.msra.mxu0 0
    %180 = vmatprep.subr.bf16.mxu0 0
    %181 = vmatpush1.bf16.msra.mxu0 0
    %182 = vmatprep.subr.bf16.mxu0 0
    %183 = vmatpush1.bf16.msra.mxu0 0
    %184 = vmatprep.subr.bf16.mxu0 0
    %185 = vmatpush1.bf16.msra.mxu0 0
    %186 = vmatprep.mubr.bf16.mxu0 0
    %187 = vmatmul.mubr.bf16.gmra.mrb[0].mxu0 %v152
    %v188 = vpop.f32.mrb[0].mxu0
    %v189 = vadd.f32 %v124, %v188
    %v190 = vpop.f32.mrb[0].mxu0
    %v191 = vpop.f32.mrb[0].mxu0
    %v192 = vpop.f32.mrb[0].mxu0
    %193 = vdwg.mxu0
    %v194 = vmax.f32 %v189, 0.0
    %v195 = vpack.c.bf16 %v194, %v194
    %v196 = vld [vmem:[%s5] sm:$0xf]
    %v197 = vld [vmem:[%s5 + $0x4] sm:$0xf]
    %v198 = vld [vmem:[%s5 + $0x8] sm:$0xf]
    %v199 = vld [vmem:[%s5 + $0xc] sm:$0xf]
    %v200 = vld [vmem:[%s5 + $0x10] sm:$0xf]
    %v201 = vld [vmem:[%s5 + $0x14] sm:$0xf]
    %v202 = vld [vmem:[%s5 + $0x18] sm:$0xf]
    %v203 = vld [vmem:[%s5 + $0x1c] sm:$0xf]
    %v204 = vld [vmem:[%s6] sm:$0x1]
    %v206 = vlaneseq
    %v207 = vshrl.u32 %v206, 7
    %v208 = vsub.s32 0, %v207
    %v209 = vrot.slane %v204, %v208
    %v219 = vunpack.c.l.b16 %v196
    %v220 = vunpack.c.l.b16 %v197
    %v221 = vunpack.c.l.b16 %v198
    %v222 = vunpack.c.l.b16 %v199
    %v223 = vunpack.c.l.b16 %v200
    %v224 = vunpack.c.l.b16 %v201
    %v225 = vunpack.c.l.b16 %v202
    %v226 = vunpack.c.l.b16 %v203
    %v227 = vpack.c.b16 %v220, %v219
    %v228 = vpack.c.b16 %v222, %v221
    %v229 = vpack.c.b16 %v224, %v223
    %v230 = vpack.c.b16 %v226, %v225
    %v236 = vsel %vm150, %v195, 0
    %238 = vmatprep.subr.bf16.mxu0 0
    %239 = vmatpush1.bf16.msra.mxu0 %v227
    %240 = vmatprep.subr.bf16.mxu0 0
    %241 = vmatpush1.bf16.msra.mxu0 %v228
    %242 = vmatprep.subr.bf16.mxu0 0
    %243 = vmatpush1.bf16.msra.mxu0 %v229
    %244 = vmatprep.subr.bf16.mxu0 0
    %245 = vmatpush1.bf16.msra.mxu0 %v230
    %246 = vmatprep.subr.bf16.mxu0 0
    %247 = vmatpush1.bf16.msra.mxu0 0
    %248 = vmatprep.subr.bf16.mxu0 0
    %249 = vmatpush1.bf16.msra.mxu0 0
    %250 = vmatprep.subr.bf16.mxu0 0
    %251 = vmatpush1.bf16.msra.mxu0 0
    %252 = vmatprep.subr.bf16.mxu0 0
    %253 = vmatpush1.bf16.msra.mxu0 0
    %254 = vmatprep.subr.bf16.mxu0 0
    %255 = vmatpush1.bf16.msra.mxu0 0
    %256 = vmatprep.subr.bf16.mxu0 0
    %257 = vmatpush1.bf16.msra.mxu0 0
    %258 = vmatprep.subr.bf16.mxu0 0
    %259 = vmatpush1.bf16.msra.mxu0 0
    %260 = vmatprep.subr.bf16.mxu0 0
    %261 = vmatpush1.bf16.msra.mxu0 0
    %262 = vmatprep.subr.bf16.mxu0 0
    %263 = vmatpush1.bf16.msra.mxu0 0
    %264 = vmatprep.subr.bf16.mxu0 0
    %265 = vmatpush1.bf16.msra.mxu0 0
    %266 = vmatprep.subr.bf16.mxu0 0
    %267 = vmatpush1.bf16.msra.mxu0 0
    %268 = vmatprep.subr.bf16.mxu0 0
    %269 = vmatpush1.bf16.msra.mxu0 0
    %270 = vmatprep.mubr.bf16.mxu0 0
    %271 = vmatmul.mubr.bf16.gmra.mrb[0].mxu0 %v236
    %v272 = vpop.f32.mrb[0].mxu0
    %v273 = vadd.f32 %v209, %v272
    %v274 = vpop.f32.mrb[0].mxu0
    %v275 = vpop.f32.mrb[0].mxu0
    %v276 = vpop.f32.mrb[0].mxu0
    %277 = vdwg.mxu0
    %vm278 = vcmask 191488
    %279 = vst.msk [vmem:[#allocation5] sm:$0xf] %vm278, %v273
    // Predicated region
    $region34: #{tpu_custom_call.1} parent=1 // pred_check
      _
    $region35: #{tpu_custom_call.1} parent=1 // pred_check_branch
      %281 = sbr.rel (0) target = $region37
    $region36: #{tpu_custom_call.1} parent=1 // pred_region
      %s283 = ssub.s32 64, 64
      %284 = vsyncadd [#allocation4], %s283
      %s286 = sshll.u32 [#allocation5], 4
      %s287 = int_to_ptr.vmem [resolvable:$true] %s286
      %289 = dma.vmem_to_hbm [thread:$0]  %s287, 64, %s7, [#allocation4]
    $region37: #{tpu_custom_call.1} parent=1 // pred_fallthru
      _
    // Predicated region
    $region38: #{tpu_custom_call.1} parent=1 // pred_check
      _
    $region39: #{tpu_custom_call.1} parent=1 // pred_check_branch
      %291 = sbr.rel (0) target = $region41
    $region40: #{tpu_custom_call.1} parent=1 // pred_region
      %292 = dma.done [#allocation4], 64
    $region41: #{tpu_custom_call.1} parent=1 // pred_fallthru
      _
    %293 = vsyncpa [#allocation3], 1
    %294 = vsyncpa [#allocation4], 1

</llo_original>
